<compile_context>
chip_gen: v7x
topology: tpu7x:2x2x1
jax: 0.10.0
libtpu: 0.0.40
codegen_flags: <defaults>
</compile_context>

<pallas_src>
import jax
import jax.numpy as jnp
from jax.experimental import pallas as pl
from jax.experimental.pallas import tpu as pltpu


def patch_embed_kernel(patches_ref, weight_ref, posb_ref, out_ref):
    # patches_ref: (TN, K) bf16   weight_ref: (K, D) bf16
    # posb_ref:    (TN, D) bf16   out_ref:    (TN, D) out_dtype
    acc = jnp.dot(patches_ref[...], weight_ref[...],
                  preferred_element_type=jnp.float32)            # MXU, f32 accum
    out_ref[...] = (acc + posb_ref[...].astype(jnp.float32)).astype(out_ref.dtype)


def _pick_tile_n(n, preferred=256):
    """Token-tile size in the 128-256 range (multiple of 8); need NOT divide N.

    The grid uses cdiv and Pallas clips the boundary block. Large N -> 256
    (fills the 256-wide v6e/v7x MXU M dim); mid N -> 128; small N -> two
    roughly equal multiple-of-8 tiles so there are always >=2 grid steps per
    image (pipeline overlap + v7x dual-TC use even at B == 1).
    """
    if n >= 2 * preferred:
        return preferred
    if n >= 256:
        return 128
    if n > 16:
        return (((n + 1) // 2) + 7) // 8 * 8
    return n


def prepare_siglip_embedding_params(conv_weight, conv_bias, pos_embedding,
                                    compute_dtype=jnp.bfloat16,
                                    table_dtype=jnp.bfloat16):
    """One-time param prep (hoisted out of the per-call hot path).

    conv_weight: (D, C, P, P), conv_bias: (D,), pos_embedding: (N, D).
    Returns the (K, D) matmul weight in compute_dtype and (pos_emb + conv_bias)
    folded exactly in f32, then stored in table_dtype (bf16 by default).
    """
    D, C, P, _ = conv_weight.shape
    K = C * P * P
    w_kd = conv_weight.reshape(D, K).T.astype(compute_dtype)              # (K, D)
    pos_plus_bias = (pos_embedding.astype(jnp.float32)
                     + conv_bias.astype(jnp.float32)[None, :]).astype(table_dtype)
    return {
        "w_kd": w_kd,
        "pos_plus_bias": pos_plus_bias,
        "patch_size": P,
        "compute_dtype": compute_dtype,
    }


def siglip_vision_embeddings(pixel_values, params, *, tile_n=None, out_dtype=None):
    """pixel_values: (B, C, H, W) NCHW. Returns (B, N, D)."""
    w_kd = params["w_kd"]
    posb = params["pos_plus_bias"]
    P = params["patch_size"]
    cdt = params["compute_dtype"]

    B, C, H, W = pixel_values.shape
    K, D = w_kd.shape
    Hp, Wp = H // P, W // P
    N = Hp * Wp
    assert K == C * P * P and posb.shape == (N, D)
    if out_dtype is None:
        out_dtype = cdt          # bf16 writeback by default (halves output stream)

    # --- XLA glue: patchify in the compute dtype (bf16 halves this HBM pass) ---
    # (B,C,H,W) -> (B,C,Hp,P,Wp,P) -> (B,Hp,Wp,C,P,P) -> (B,N,K); feature order
    # (c,kh,kw) matches the (K, D) weight layout built in prepare_*.
    x = pixel_values.astype(cdt)
    patches = x.reshape(B, C, Hp, P, Wp, P).transpose(0, 2, 4, 1, 3, 5).reshape(B, N, K)

    if tile_n is None:
        tile_n = _pick_tile_n(N)
    n_tiles = pl.cdiv(N, tile_n)           # boundary block handled by Pallas clipping

    flops = 2 * B * N * K * D
    bytes_accessed = (B * N * K * patches.dtype.itemsize
                      + K * D * w_kd.dtype.itemsize
                      + N * D * posb.dtype.itemsize
                      + B * N * D * jnp.dtype(out_dtype).itemsize)

    out = pl.pallas_call(
        patch_embed_kernel,
        out_shape=jax.ShapeDtypeStruct((B, N, D), out_dtype),
        grid_spec=pltpu.PrefetchScalarGridSpec(
            num_scalar_prefetch=0,
            # Inner (fastest) axis = batch: the pos table block is invariant
            # along it, so it is streamed once per token tile, not once per b.
            grid=(n_tiles, B),
            in_specs=[
                pl.BlockSpec((pl.Squeezed(), tile_n, K),
                             lambda nt, b: (b, nt, 0)),                 # patches
                pl.BlockSpec((K, D), lambda nt, b: (0, 0)),             # weight (grid-invariant)
                pl.BlockSpec((tile_n, D), lambda nt, b: (nt, 0)),       # pos + bias (b-invariant)
            ],
            out_specs=pl.BlockSpec((pl.Squeezed(), tile_n, D),
                                   lambda nt, b: (b, nt, 0)),
        ),
        compiler_params=pltpu.CompilerParams(
            dimension_semantics=("parallel", "parallel")),
        cost_estimate=pl.CostEstimate(flops=flops, transcendentals=0,
                                      bytes_accessed=bytes_accessed),
    )(patches, w_kd, posb)
    return out


def reference(pixel_values, conv_weight, conv_bias, pos_embedding, patch_size):
    # Pure-JAX f32 reference via lax conv (NCHW, OIHW).
    y = jax.lax.conv_general_dilated(
        pixel_values, conv_weight,
        window_strides=(patch_size, patch_size), padding="VALID",
        dimension_numbers=("NCHW", "OIHW", "NCHW"))
    y = y + conv_bias.reshape(1, -1, 1, 1)
    B, D, Hp, Wp = y.shape
    y = y.reshape(B, D, Hp * Wp).transpose(0, 2, 1)   # flatten(2).transpose(1,2)
    return y + pos_embedding[None, :, :]


if __name__ == "__main__":
    # Small but lane-dense config: hidden=256 (2x128 lanes), channels=3,
    # image=64, patch=8 -> 64 tokens, K=192.
    B, C, IMG, P, D = 2, 3, 64, 8, 256
    Hp = IMG // P
    N = Hp * Hp
    K = C * P * P

    key = jax.random.PRNGKey(0)
    k_x, k_w, k_b, k_pos = jax.random.split(key, 4)

    pixel_values = jax.random.normal(k_x, (B, C, IMG, IMG), dtype=jnp.float32)
    conv_weight = 0.02 * jax.random.normal(k_w, (D, C, P, P), dtype=jnp.float32)
    conv_bias = 0.01 * jax.random.normal(k_b, (D,), dtype=jnp.float32)
    pos_embedding = 0.02 * jax.random.normal(k_pos, (N, D), dtype=jnp.float32)

    params = prepare_siglip_embedding_params(conv_weight, conv_bias, pos_embedding)
    ref = reference(pixel_values, conv_weight, conv_bias, pos_embedding, P)

    # 1) Divisible token tile: grid (2, 2), every block in-bounds.
    out_a = siglip_vision_embeddings(pixel_values, params, tile_n=32)
    jax.block_until_ready(out_a)
    assert out_a.shape == (B, N, D)
    assert jnp.allclose(out_a.astype(jnp.float32), ref, atol=2e-2, rtol=2e-2), \
        "mismatch vs reference (divisible tile)"

    # 2) Non-divisible token tile (48 over N=64): exercises the cdiv grid with a
    #    clipped boundary block -- the path real SigLIP shapes (N=196, 729) take.
    out_b = siglip_vision_embeddings(pixel_values, params, tile_n=48)
    jax.block_until_ready(out_b)
    assert out_b.shape == (B, N, D)
    assert jnp.allclose(out_b.astype(jnp.float32), ref, atol=2e-2, rtol=2e-2), \
        "mismatch vs reference (boundary tile)"

    print("KERNEL_OK")
</pallas_src>

<mosaic_0001>
module attributes {stable_mosaic.version = 11 : i64} {
  func.func @patch_embed_kernel(%arg0: i32, %arg1: i32, %arg2: memref<1x32x192xbf16, #tpu.memory_space<vmem>>, %arg3: memref<192x256xbf16, #tpu.memory_space<vmem>>, %arg4: memref<32x256xbf16, #tpu.memory_space<vmem>>, %arg5: memref<1x32x256xbf16, #tpu.memory_space<vmem>>) attributes {dimension_semantics = [#tpu.dimension_semantics<parallel>, #tpu.dimension_semantics<parallel>], iteration_bounds = array<i64: 2, 2>, scalar_prefetch = 0 : i64, scratch_operands = 0 : i64, tpu.core_type = #tpu.core_type<tc>, window_params = [{transform_indices = @transform_0, window_bounds = array<i64: 1, 32, 192>}, {pipeline_mode = #tpu.pipeline_mode<synchronous>, transform_indices = @transform_1, window_bounds = array<i64: 192, 256>}, {transform_indices = @transform_2, window_bounds = array<i64: 32, 256>}, {transform_indices = @transform_3, window_bounds = array<i64: 1, 32, 256>}]} {
    %c0 = arith.constant 0 : index
    %c0_0 = arith.constant 0 : index
    %c0_1 = arith.constant 0 : index
    %0 = vector.load %arg2[%c0, %c0_0, %c0_1] : memref<1x32x192xbf16, #tpu.memory_space<vmem>>, vector<1x32x192xbf16>
    %1 = vector.shape_cast %0 : vector<1x32x192xbf16> to vector<32x192xbf16>
    %c0_2 = arith.constant 0 : index
    %c0_3 = arith.constant 0 : index
    %2 = vector.load %arg3[%c0_2, %c0_3] : memref<192x256xbf16, #tpu.memory_space<vmem>>, vector<192x256xbf16>
    %cst = arith.constant dense<0.000000e+00> : vector<32x256xf32>
    %3 = tpu.matmul %1, %2, %cst {dimension_numbers = #tpu.dot_dimension_numbers<[1], [0], [0], [1], [0, 0, 1, 1], [], []>} : vector<32x192xbf16>, vector<192x256xbf16>, vector<32x256xf32> -> vector<32x256xf32>
    %c0_4 = arith.constant 0 : index
    %c0_5 = arith.constant 0 : index
    %4 = vector.load %arg4[%c0_4, %c0_5] : memref<32x256xbf16, #tpu.memory_space<vmem>>, vector<32x256xbf16>
    %5 = arith.extf %4 : vector<32x256xbf16> to vector<32x256xf32>
    %6 = arith.addf %3, %5 : vector<32x256xf32>
    %7 = arith.truncf %6 : vector<32x256xf32> to vector<32x256xbf16>
    %c0_6 = arith.constant 0 : index
    %c0_7 = arith.constant 0 : index
    %c0_8 = arith.constant 0 : index
    %8 = vector.load %arg5[%c0_6, %c0_7, %c0_8] : memref<1x32x256xbf16, #tpu.memory_space<vmem>>, vector<1x32x256xbf16>
    %9 = vector.shape_cast %8 : vector<1x32x256xbf16> to vector<32x256xbf16>
    %10 = vector.shape_cast %7 : vector<32x256xbf16> to vector<1x32x256xbf16>
    tpu.vector_store %arg5[%c0_6, %c0_7, %c0_8], %10 {strides = array<i32>} : memref<1x32x256xbf16, #tpu.memory_space<vmem>>, vector<1x32x256xbf16>,
    return
  }
  func.func @transform_0(%arg0: i32, %arg1: i32) -> (i32, i32, i32) {
    %c0_i32 = arith.constant 0 : i32
    %c0_i32_0 = arith.constant 0 : i32
    return %arg1, %arg0, %c0_i32 : i32, i32, i32
  }
  func.func @transform_1(%arg0: i32, %arg1: i32) -> (i32, i32) {
    %c0_i32 = arith.constant 0 : i32
    %c0_i32_0 = arith.constant 0 : i32
    %c0_i32_1 = arith.constant 0 : i32
    return %c0_i32, %c0_i32_0 : i32, i32
  }
  func.func @transform_2(%arg0: i32, %arg1: i32) -> (i32, i32) {
    %c0_i32 = arith.constant 0 : i32
    %c0_i32_0 = arith.constant 0 : i32
    return %arg0, %c0_i32 : i32, i32
  }
  func.func @transform_3(%arg0: i32, %arg1: i32) -> (i32, i32, i32) {
    %c0_i32 = arith.constant 0 : i32
    %c0_i32_0 = arith.constant 0 : i32
    return %arg1, %arg0, %c0_i32 : i32, i32, i32
  }
}

</mosaic_0001>

<llo_original>
// kernel: tpu_custom_call.1
$region0: #{tpu_custom_call.1}
  #allocation0 [shape = 'u32[]', space=smem, size = 0x4, offset = 0x4, fixed_abs, tag = 'smem constant byte address 0x4 - core index']
  #allocation1 [shape = 'u32[144,128]{1,0:T(1,128)}', space=vmem, size = 0x12000, scoped, tag = 'internal scratch']
  %s0 = inlined_call_operand.hbm [shape: bf16[2,64,192], index: 0, kind: input, shape index: {}]
  %s1 = inlined_call_operand.hbm [shape: bf16[192,256], index: 1, kind: input, shape index: {}]
  %s2 = inlined_call_operand.hbm [shape: bf16[64,256], index: 2, kind: input, shape index: {}]
  %s3 = inlined_call_operand.hbm [shape: bf16[2,64,256], index: 3, kind: output, shape index: {}]
  %s4 = sld [smem:[#allocation0]]
  $region57: #{tpu_custom_call.1} parent=0
    _
  %s6 = ssub.s32 1, %s4
  %s7 = scalar_select 0, %s6, %s4
  $region1: #{tpu_custom_call.1} parent=0
    #allocation2 [shape = 'u8[32768]{0}', space=vmem, size = 0x8000, scoped, tag = 'input window, operand 0']
    #allocation3 [shape = 's32[2]{0}', space=sflag, size = 0x8, scoped, tag = 'scoped memory for tpu_custom_call.1']
    #allocation4 [shape = 's32[2]{0}', space=sflag, size = 0x8, scoped, tag = 'scoped memory for tpu_custom_call.1']
    #allocation5 [shape = 'u8[98304]{0}', space=vmem, size = 0x18000, scoped, tag = 'input window, operand 1, single buffered']
    #allocation6 [shape = 's32[1]{0}', space=sflag, size = 0x4, scoped, tag = 'scoped memory for tpu_custom_call.1']
    #allocation7 [shape = 'u8[32768]{0}', space=vmem, size = 0x8000, scoped, tag = 'input window, operand 2']
    #allocation8 [shape = 'u8[32768]{0}', space=vmem, size = 0x8000, scoped, tag = 'output window, operand 0']
    %8 = vsyncpa [#allocation3], 0
    %s9 = scalar_lea.sflag [#allocation3], 1
    %10 = vsyncpa %s9, 0
    %11 = vsyncpa [#allocation6], 0
    %12 = vsyncpa [#allocation4], 0
    %s13 = scalar_lea.sflag [#allocation4], 1
    %14 = vsyncpa %s13, 0
    loop: start=0, step=1, limit=6
    $region2: #{tpu_custom_call.1} parent=1 // loop_pre_header
      _
    $region3: #{tpu_custom_call.1} parent=1 // loop_header
      %s16 = sphi 0, %s20
      %p17 = scmp.ge.s32.totalorder %s16, 6
      %s23 = sphi 0, %s35
      %s24 = sphi 0, %s31
      %s25 = sphi 0, %s23
      %s26 = sphi 0, %s24
      %s27 = sphi 0, %s25
      %s28 = sphi 0, %s26
      %s40 = sphi 0, %s42
      %s43 = sphi 0, %s40
      %s44 = sphi 0, %s43
      %s60 = sphi 0, %s44
      %s64 = sphi 0, %s64
      %s66 = sphi 0, %s64
      %s67 = sphi 0, %s66
      %s81 = sphi 0, %s67
      %s87 = sphi 0, %s89
      %s90 = sphi 0, %s87
      %s91 = sphi 0, %s90
      %s107 = sphi 0, %s91
      %s115 = sphi 0, %s117
      %s118 = sphi 0, %s115
      %s119 = sphi 0, %s118
      %s135 = sphi 0, %s119
    $region4: #{tpu_custom_call.1} parent=1 // loop_header_branch
      %19 = sbr.rel (%p17) target = $region8
    $region5: #{tpu_custom_call.1} parent=1 // loop_body
      %s21 = ssub.s32 %s16, 1
      %s22 = ssub.s32 %s16, 2
      %s29 = sadd.s32 1, %s24
      %p30 = scmp.ge.s32.totalorder %s29, 2
      %s31 = scalar_select %p30, 0, %s29
      %s32 = sadd.s32 1, %s23
      %s33 = scalar_select %p30, %s32, %s23
      %p34 = scmp.ge.s32.totalorder %s33, 2
      %s35 = scalar_select %p34, 0, %s33
      %s36 = ssub.s32 %s24, %s31
      %s37 = ssub.s32 %s23, %s35
      %s38 = sor.u32 %s36, %s37
      %p39 = scmp.eq.s32.totalorder %s38, 0
      %s41 = sadd.s32 %s40, 1
      %s42 = scalar_select %p39, %s40, %s41
      %p45 = pneg %p39
      %p46 = scmp.eq.s32.totalorder %s16, 3
      %p47 = por %p45, %p46
      %p48 = scmp.ne.s32.totalorder %s40, %s43
      %p49 = scmp.eq.s32.totalorder %s16, 0
      %p50 = por %p48, %p49
      %p51 = scmp.ne.s32.totalorder %s40, %s43
      %p52 = scmp.eq.s32.totalorder %s21, 3
      %p53 = por %p51, %p52
      %p54 = scmp.ne.s32.totalorder %s43, %s44
      %p55 = scmp.eq.s32.totalorder %s21, 0
      %p56 = por %p54, %p55
      %p57 = scmp.ne.s32.totalorder %s43, %s44
      %p58 = scmp.eq.s32.totalorder %s22, 3
      %p59 = por %p57, %p58
      %p61 = scmp.ne.s32.totalorder %s44, %s60
      %p62 = scmp.eq.s32.totalorder %s22, 0
      %p63 = por %p61, %p62
      %s65 = sadd.s32 %s64, 1
      %p68 = scmp.eq.s32.totalorder %s16, 3
      %p69 = scmp.ne.s32.totalorder %s64, %s66
      %p70 = scmp.eq.s32.totalorder %s16, 0
      %p71 = por %p69, %p70
      %p72 = scmp.ne.s32.totalorder %s64, %s66
      %p73 = scmp.eq.s32.totalorder %s21, 3
      %p74 = por %p72, %p73
      %p75 = scmp.ne.s32.totalorder %s66, %s67
      %p76 = scmp.eq.s32.totalorder %s21, 0
      %p77 = por %p75, %p76
      %p78 = scmp.ne.s32.totalorder %s66, %s67
      %p79 = scmp.eq.s32.totalorder %s22, 3
      %p80 = por %p78, %p79
      %p82 = scmp.ne.s32.totalorder %s67, %s81
      %p83 = scmp.eq.s32.totalorder %s22, 0
      %p84 = por %p82, %p83
      %s85 = ssub.s32 %s23, %s35
      %p86 = scmp.eq.s32.totalorder %s85, 0
      %s88 = sadd.s32 %s87, 1
      %s89 = scalar_select %p86, %s87, %s88
      %p92 = pneg %p86
      %p93 = scmp.eq.s32.totalorder %s16, 3
      %p94 = por %p92, %p93
      %p95 = scmp.ne.s32.totalorder %s87, %s90
      %p96 = scmp.eq.s32.totalorder %s16, 0
      %p97 = por %p95, %p96
      %p98 = scmp.ne.s32.totalorder %s87, %s90
      %p99 = scmp.eq.s32.totalorder %s21, 3
      %p100 = por %p98, %p99
      %p101 = scmp.ne.s32.totalorder %s90, %s91
      %p102 = scmp.eq.s32.totalorder %s21, 0
      %p103 = por %p101, %p102
      %p104 = scmp.ne.s32.totalorder %s90, %s91
      %p105 = scmp.eq.s32.totalorder %s22, 3
      %p106 = por %p104, %p105
      %p108 = scmp.ne.s32.totalorder %s91, %s107
      %p109 = scmp.eq.s32.totalorder %s22, 0
      %p110 = por %p108, %p109
      %s111 = ssub.s32 %s24, %s31
      %s112 = ssub.s32 %s23, %s35
      %s113 = sor.u32 %s111, %s112
      %p114 = scmp.eq.s32.totalorder %s113, 0
      %s116 = sadd.s32 %s115, 1
      %s117 = scalar_select %p114, %s115, %s116
      %p120 = pneg %p114
      %p121 = scmp.eq.s32.totalorder %s16, 3
      %p122 = por %p120, %p121
      %p123 = scmp.ne.s32.totalorder %s115, %s118
      %p124 = scmp.eq.s32.totalorder %s16, 0
      %p125 = por %p123, %p124
      %p126 = scmp.ne.s32.totalorder %s115, %s118
      %p127 = scmp.eq.s32.totalorder %s21, 3
      %p128 = por %p126, %p127
      %p129 = scmp.ne.s32.totalorder %s118, %s119
      %p130 = scmp.eq.s32.totalorder %s21, 0
      %p131 = por %p129, %p130
      %p132 = scmp.ne.s32.totalorder %s118, %s119
      %p133 = scmp.eq.s32.totalorder %s22, 3
      %p134 = por %p132, %p133
      %p136 = scmp.ne.s32.totalorder %s119, %s135
      %p137 = scmp.eq.s32.totalorder %s22, 0
      %p138 = por %p136, %p137
      %p139 = scmp.le.s32.totalorder 1, %s16
      %p140 = scmp.lt.s32.totalorder %s16, 5
      %p141 = pnand %p139, %p140
      %p142 = pneg %p141
      // Predicated region
      $region9: #{tpu_custom_call.1} parent=5 // pred_check
        _
      $region10: #{tpu_custom_call.1} parent=5 // pred_check_branch
        %144 = sbr.rel (%p141) target = $region12
      $region11: #{tpu_custom_call.1} parent=5 // pred_region
        %s145 = ssub.s32 %s16, 1
        // Predicated region
        $region13: #{tpu_custom_call.1} parent=11 // pred_check
          %p146 = pneg %p77
        $region14: #{tpu_custom_call.1} parent=11 // pred_check_branch
          %148 = sbr.rel (%p146) target = $region16
        $region15: #{tpu_custom_call.1} parent=11 // pred_region
          %s150 = ssub.s32 3072, 3072
          %151 = vsyncadd [#allocation6], %s150
          %s152 = sshll.u32 [#allocation5], 4
          %s153 = int_to_ptr.vmem [resolvable:$true] %s152
          %158 = dma.hbm_to_vmem [thread:$0]  %s1, 3072, %s153, [#allocation6], 128, 128, 8
        $region16: #{tpu_custom_call.1} parent=11 // pred_fallthru
          _
      $region12: #{tpu_custom_call.1} parent=5 // pred_fallthru
        _
      %p159 = scmp.lt.s32.totalorder %s16, 4
      // Predicated region
      $region17: #{tpu_custom_call.1} parent=5 // pred_check
        %p160 = pneg %p159
      $region18: #{tpu_custom_call.1} parent=5 // pred_check_branch
        %162 = sbr.rel (%p160) target = $region20
      $region19: #{tpu_custom_call.1} parent=5 // pred_region
        // Predicated region
        $region21: #{tpu_custom_call.1} parent=19 // pred_check
          %p163 = pneg %p50
        $region22: #{tpu_custom_call.1} parent=19 // pred_check_branch
          %165 = sbr.rel (%p163) target = $region24
        $region23: #{tpu_custom_call.1} parent=19 // pred_region
          %s166 = sand.u32 %s16, 1
          %s167 = scalar_lea.sflag [#allocation3], %s166
          %s168 = sand.u32 %s40, 1
          %s169 = smul.addr %s168, 32
          %s170 = scalar_lea.vmem [#allocation2], %s169
          %s171 = smul.u32 4, %s23
          %s173 = ssub.s32 512, 512
          %174 = vsyncadd %s167, %s173
          %s175 = smul.addr %s171, 2
          %s176 = smul.addr %s24, 16
          %s177 = sadd.s32 %s175, %s176
          %s178 = smul.addr %s177, 64
          %s179 = scalar_lea.hbm %s0, %s178
          %s180 = sshll.u32 %s170, 4
          %s181 = int_to_ptr.vmem [resolvable:$true] %s180
          %186 = dma.hbm_to_vmem [thread:$0]  %s179, 512, %s181, %s167, 128, 128, 8
        $region24: #{tpu_custom_call.1} parent=19 // pred_fallthru
          _
        // Predicated region
        $region25: #{tpu_custom_call.1} parent=19 // pred_check
          %p187 = pneg %p97
        $region26: #{tpu_custom_call.1} parent=19 // pred_check_branch
          %189 = sbr.rel (%p187) target = $region28
        $region27: #{tpu_custom_call.1} parent=19 // pred_region
          %s190 = sand.u32 %s16, 1
          %s191 = scalar_lea.sflag [#allocation3], %s190
          %s192 = sand.u32 %s87, 1
          %s193 = smul.addr %s192, 32
          %s194 = scalar_lea.vmem [#allocation7], %s193
          %s195 = smul.u32 4, %s23
          %s197 = ssub.s32 512, 512
          %198 = vsyncadd %s191, %s197
          %s199 = smul.addr %s195, 2
          %s200 = smul.addr %s199, 64
          %s201 = scalar_lea.hbm %s2, %s200
          %s202 = sshll.u32 %s194, 4
          %s203 = int_to_ptr.vmem [resolvable:$true] %s202
          %208 = dma.hbm_to_vmem [thread:$0]  %s201, 512, %s203, %s191, 128, 128, 8
        $region28: #{tpu_custom_call.1} parent=19 // pred_fallthru
          _
      $region20: #{tpu_custom_call.1} parent=5 // pred_fallthru
        _
      %p209 = scmp.le.s32.totalorder 1, %s16
      %p210 = scmp.lt.s32.totalorder %s16, 5
      %p211 = pnand %p209, %p210
      %p212 = pneg %p211
      // Predicated region
      $region29: #{tpu_custom_call.1} parent=5 // pred_check
        _
      $region30: #{tpu_custom_call.1} parent=5 // pred_check_branch
        %214 = sbr.rel (%p211) target = $region32
      $region31: #{tpu_custom_call.1} parent=5 // pred_region
        %s215 = ssub.s32 %s16, 1
        %s216 = sand.u32 %s21, 1
        %s217 = scalar_lea.sflag [#allocation3], %s216
        %s218 = sand.u32 %s43, 1
        %s219 = smul.addr %s218, 32
        %s220 = scalar_lea.vmem [#allocation2], %s219
        // Predicated region
        $region33: #{tpu_custom_call.1} parent=31 // pred_check
          %p221 = pneg %p56
        $region34: #{tpu_custom_call.1} parent=31 // pred_check_branch
          %223 = sbr.rel (%p221) target = $region36
        $region35: #{tpu_custom_call.1} parent=31 // pred_region
          %224 = dma.done %s217, 512
        $region36: #{tpu_custom_call.1} parent=31 // pred_fallthru
          _
        // Predicated region
        $region37: #{tpu_custom_call.1} parent=31 // pred_check
          %p225 = pneg %p77
        $region38: #{tpu_custom_call.1} parent=31 // pred_check_branch
          %227 = sbr.rel (%p225) target = $region40
        $region39: #{tpu_custom_call.1} parent=31 // pred_region
          %228 = dma.done [#allocation6], 3072
        $region40: #{tpu_custom_call.1} parent=31 // pred_fallthru
          _
        %s229 = sand.u32 %s21, 1
        %s230 = scalar_lea.sflag [#allocation3], %s229
        %s231 = sand.u32 %s90, 1
        %s232 = smul.addr %s231, 32
        %s233 = scalar_lea.vmem [#allocation7], %s232
        // Predicated region
        $region41: #{tpu_custom_call.1} parent=31 // pred_check
          %p234 = pneg %p103
        $region42: #{tpu_custom_call.1} parent=31 // pred_check_branch
          %236 = sbr.rel (%p234) target = $region44
        $region43: #{tpu_custom_call.1} parent=31 // pred_region
          %237 = dma.done %s230, 512
        $region44: #{tpu_custom_call.1} parent=31 // pred_fallthru
          _
        %s238 = sand.u32 %s21, 1
        %s239 = scalar_lea.sflag [#allocation3], %s238
        %s240 = sand.u32 %s43, 1
        %s241 = smul.addr %s240, 32
        %s242 = scalar_lea.vmem [#allocation2], %s241
        %p243 = pneg %p56
        %p244 = pneg %p53
        %p245 = pneg %p77
        %p246 = pneg %p74
        %s247 = sand.u32 %s21, 1
        %s248 = scalar_lea.sflag [#allocation3], %s247
        %s249 = sand.u32 %s90, 1
        %s250 = smul.addr %s249, 32
        %s251 = scalar_lea.vmem [#allocation7], %s250
        %p252 = pneg %p103
        %p253 = pneg %p100
        %p254 = pneg %p131
        %p255 = pneg %p128
        %s256 = sand.u32 %s118, 1
        %s257 = scalar_lea.sflag [#allocation4], %s256
        %s258 = sand.u32 %s118, 1
        %s259 = smul.addr %s258, 32
        %s260 = scalar_lea.vmem [#allocation8], %s259
        %s261 = smul.u32 4, %s25
        %s262 = smul.u32 4, %s25
        %s263 = smul.u32 4, %s25
        %v265 = vld [vmem:[%s220] sm:$0xff]
        %v266 = vld [vmem:[%s220 + $0x8] sm:$0xff]
        %v267 = vld [vmem:[%s220 + $0x10] sm:$0xff]
        %v268 = vld [vmem:[%s220 + $0x18] sm:$0xff]
        %v269 = vld [vmem:[#allocation5] sm:$0xff]
        %v270 = vld [vmem:[#allocation5 + $0x8] sm:$0xff]
        %v271 = vld [vmem:[#allocation5 + $0x10] sm:$0xff]
        %v272 = vld [vmem:[#allocation5 + $0x18] sm:$0xff]
        %v273 = vld [vmem:[#allocation5 + $0x20] sm:$0xff]
        %v274 = vld [vmem:[#allocation5 + $0x28] sm:$0xff]
        %v275 = vld [vmem:[#allocation5 + $0x30] sm:$0xff]
        %v276 = vld [vmem:[#allocation5 + $0x38] sm:$0xff]
        %v277 = vld [vmem:[#allocation5 + $0x40] sm:$0xff]
        %v278 = vld [vmem:[#allocation5 + $0x48] sm:$0xff]
        %v279 = vld [vmem:[#allocation5 + $0x50] sm:$0xff]
        %v280 = vld [vmem:[#allocation5 + $0x58] sm:$0xff]
        %v281 = vld [vmem:[#allocation5 + $0x60] sm:$0xff]
        %v282 = vld [vmem:[#allocation5 + $0x68] sm:$0xff]
        %v283 = vld [vmem:[#allocation5 + $0x70] sm:$0xff]
        %v284 = vld [vmem:[#allocation5 + $0x78] sm:$0xff]
        %v285 = vld [vmem:[#allocation5 + $0x80] sm:$0xff]
        %v286 = vld [vmem:[#allocation5 + $0x88] sm:$0xff]
        %v287 = vld [vmem:[#allocation5 + $0x90] sm:$0xff]
        %v288 = vld [vmem:[#allocation5 + $0x98] sm:$0xff]
        %v289 = vld [vmem:[#allocation5 + $0xa0] sm:$0xff]
        %v290 = vld [vmem:[#allocation5 + $0xa8] sm:$0xff]
        %v291 = vld [vmem:[#allocation5 + $0xb0] sm:$0xff]
        %v292 = vld [vmem:[#allocation5 + $0xb8] sm:$0xff]
        %v293 = vld [vmem:[%s233] sm:$0xff]
        %v294 = vld [vmem:[%s233 + $0x8] sm:$0xff]
        %v295 = vld [vmem:[%s233 + $0x10] sm:$0xff]
        %v296 = vld [vmem:[%s233 + $0x18] sm:$0xff]
        %v297 = vunpack.c.l.bf16 %v293
        %v298 = vunpack.c.h.bf16 %v293
        %v299 = vunpack.c.l.bf16 %v294
        %v300 = vunpack.c.h.bf16 %v294
        %v301 = vunpack.c.l.bf16 %v295
        %v302 = vunpack.c.h.bf16 %v295
        %v303 = vunpack.c.l.bf16 %v296
        %v304 = vunpack.c.h.bf16 %v296
        %v309 = vunpack.c.l.b16 %v265
        %v310 = vunpack.c.h.b16 %v265
        %v311 = vunpack.c.l.b16 %v266
        %v312 = vunpack.c.h.b16 %v266
        %v313 = vunpack.c.l.b16 %v267
        %v314 = vunpack.c.h.b16 %v267
        %v315 = vunpack.c.l.b16 %v268
        %v316 = vunpack.c.h.b16 %v268
        %v317 = vpack.c.b16 %v311, %v309
        %v318 = vpack.c.b16 %v312, %v310
        %v319 = vpack.c.b16 %v315, %v313
        %v320 = vpack.c.b16 %v316, %v314
        %v347 = vunpack.c.l.b16 %v269
        %v348 = vunpack.c.h.b16 %v269
        %v349 = vunpack.c.l.b16 %v270
        %v350 = vunpack.c.h.b16 %v270
        %v351 = vunpack.c.l.b16 %v271
        %v352 = vunpack.c.h.b16 %v271
        %v353 = vunpack.c.l.b16 %v272
        %v354 = vunpack.c.h.b16 %v272
        %v355 = vunpack.c.l.b16 %v273
        %v356 = vunpack.c.h.b16 %v273
        %v357 = vunpack.c.l.b16 %v274
        %v358 = vunpack.c.h.b16 %v274
        %v359 = vunpack.c.l.b16 %v275
        %v360 = vunpack.c.h.b16 %v275
        %v361 = vunpack.c.l.b16 %v276
        %v362 = vunpack.c.h.b16 %v276
        %v363 = vunpack.c.l.b16 %v277
        %v364 = vunpack.c.h.b16 %v277
        %v365 = vunpack.c.l.b16 %v278
        %v366 = vunpack.c.h.b16 %v278
        %v367 = vunpack.c.l.b16 %v279
        %v368 = vunpack.c.h.b16 %v279
        %v369 = vunpack.c.l.b16 %v280
        %v370 = vunpack.c.h.b16 %v280
        %v371 = vunpack.c.l.b16 %v281
        %v372 = vunpack.c.h.b16 %v281
        %v373 = vunpack.c.l.b16 %v282
        %v374 = vunpack.c.h.b16 %v282
        %v375 = vunpack.c.l.b16 %v283
        %v376 = vunpack.c.h.b16 %v283
        %v377 = vunpack.c.l.b16 %v284
        %v378 = vunpack.c.h.b16 %v284
        %v379 = vunpack.c.l.b16 %v285
        %v380 = vunpack.c.h.b16 %v285
        %v381 = vunpack.c.l.b16 %v286
        %v382 = vunpack.c.h.b16 %v286
        %v383 = vunpack.c.l.b16 %v287
        %v384 = vunpack.c.h.b16 %v287
        %v385 = vunpack.c.l.b16 %v288
        %v386 = vunpack.c.h.b16 %v288
        %v387 = vunpack.c.l.b16 %v289
        %v388 = vunpack.c.h.b16 %v289
        %v389 = vunpack.c.l.b16 %v290
        %v390 = vunpack.c.h.b16 %v290
        %v391 = vunpack.c.l.b16 %v291
        %v392 = vunpack.c.h.b16 %v291
        %v393 = vunpack.c.l.b16 %v292
        %v394 = vunpack.c.h.b16 %v292
        %v395 = vpack.c.b16 %v349, %v347
        %v396 = vpack.c.b16 %v350, %v348
        %v397 = vpack.c.b16 %v353, %v351
        %v398 = vpack.c.b16 %v354, %v352
        %v399 = vpack.c.b16 %v357, %v355
        %v400 = vpack.c.b16 %v358, %v356
        %v401 = vpack.c.b16 %v361, %v359
        %v402 = vpack.c.b16 %v362, %v360
        %v403 = vpack.c.b16 %v365, %v363
        %v404 = vpack.c.b16 %v366, %v364
        %v405 = vpack.c.b16 %v369, %v367
        %v406 = vpack.c.b16 %v370, %v368
        %v407 = vpack.c.b16 %v373, %v371
        %v408 = vpack.c.b16 %v374, %v372
        %v409 = vpack.c.b16 %v377, %v375
        %v410 = vpack.c.b16 %v378, %v376
        %v411 = vpack.c.b16 %v381, %v379
        %v412 = vpack.c.b16 %v382, %v380
        %v413 = vpack.c.b16 %v385, %v383
        %v414 = vpack.c.b16 %v386, %v384
        %v415 = vpack.c.b16 %v389, %v387
        %v416 = vpack.c.b16 %v390, %v388
        %v417 = vpack.c.b16 %v393, %v391
        %v418 = vpack.c.b16 %v394, %v392
        %vm443 = vcmask 523264
        %v445 = vsel %vm443, %v318, 0
        %v448 = vsel %vm443, %v320, 0
        %450 = vmatprep.subr.bf16.mxu0 %v396
        %451 = vmatpush1.bf16.msra.mxu0 %v395
        %452 = vmatprep.subr.bf16.mxu0 %v398
        %453 = vmatpush1.bf16.msra.mxu0 %v397
        %454 = vmatprep.subr.bf16.mxu0 %v400
        %455 = vmatpush1.bf16.msra.mxu0 %v399
        %456 = vmatprep.subr.bf16.mxu0 %v402
        %457 = vmatpush1.bf16.msra.mxu0 %v401
        %458 = vmatprep.subr.bf16.mxu0 %v404
        %459 = vmatpush1.bf16.msra.mxu0 %v403
        %460 = vmatprep.subr.bf16.mxu0 %v406
        %461 = vmatpush1.bf16.msra.mxu0 %v405
        %462 = vmatprep.subr.bf16.mxu0 %v408
        %463 = vmatpush1.bf16.msra.mxu0 %v407
        %464 = vmatprep.subr.bf16.mxu0 %v410
        %465 = vmatpush1.bf16.msra.mxu0 %v409
        %466 = vmatprep.subr.bf16.mxu0 %v412
        %467 = vmatpush1.bf16.msra.mxu0 %v411
        %468 = vmatprep.subr.bf16.mxu0 %v414
        %469 = vmatpush1.bf16.msra.mxu0 %v413
        %470 = vmatprep.subr.bf16.mxu0 %v416
        %471 = vmatpush1.bf16.msra.mxu0 %v415
        %472 = vmatprep.subr.bf16.mxu0 %v418
        %473 = vmatpush1.bf16.msra.mxu0 %v417
        %474 = vmatprep.subr.bf16.mxu0 0
        %475 = vmatpush1.bf16.msra.mxu0 0
        %476 = vmatprep.subr.bf16.mxu0 0
        %477 = vmatpush1.bf16.msra.mxu0 0
        %478 = vmatprep.subr.bf16.mxu0 0
        %479 = vmatpush1.bf16.msra.mxu0 0
        %480 = vmatprep.subr.bf16.mxu0 0
        %481 = vmatpush1.bf16.msra.mxu0 0
        %482 = vmatprep.mubr.bf16.mxu0 %v445
        %483 = vmatmul.mubr.bf16.gmra.mrb[0].mxu0 %v317
        %v484 = vpop.f32.mrb[0].mxu0
        %v485 = vadd.f32 %v297, %v484
        %v486 = vpop.f32.mrb[0].mxu0
        %v487 = vadd.f32 %v298, %v486
        %v488 = vpop.f32.mrb[0].mxu0
        %v489 = vadd.f32 %v299, %v488
        %v490 = vpop.f32.mrb[0].mxu0
        %v491 = vadd.f32 %v300, %v490
        %492 = vmatprep.mubr.bf16.mxu0 %v448
        %493 = vmatmul.mubr.bf16.gmra.mrb[0].mxu0 %v319
        %v494 = vpop.f32.mrb[0].mxu0
        %v495 = vadd.f32 %v301, %v494
        %v496 = vpop.f32.mrb[0].mxu0
        %v497 = vadd.f32 %v302, %v496
        %v498 = vpop.f32.mrb[0].mxu0
        %v499 = vadd.f32 %v303, %v498
        %v500 = vpop.f32.mrb[0].mxu0
        %v501 = vadd.f32 %v304, %v500
        %502 = vdwg.mxu0
        %v503 = vpack.c.bf16 %v489, %v485
        %v504 = vpack.c.bf16 %v491, %v487
        %v505 = vpack.c.bf16 %v499, %v495
        %v506 = vpack.c.bf16 %v501, %v497
        %v511 = vunpack.c.l.b16 %v503
        %v512 = vunpack.c.l.b16 %v504
        %v513 = vunpack.c.h.b16 %v503
        %v514 = vunpack.c.h.b16 %v504
        %v515 = vunpack.c.l.b16 %v505
        %v516 = vunpack.c.l.b16 %v506
        %v517 = vunpack.c.h.b16 %v505
        %v518 = vunpack.c.h.b16 %v506
        %v519 = vpack.c.b16 %v512, %v511
        %v520 = vpack.c.b16 %v514, %v513
        %v521 = vpack.c.b16 %v516, %v515
        %v522 = vpack.c.b16 %v518, %v517
        %527 = vst [vmem:[%s260] sm:$0xff] %v519
        %528 = vst [vmem:[%s260 + $0x8] sm:$0xff] %v520
        %529 = vst [vmem:[%s260 + $0x10] sm:$0xff] %v521
        %530 = vst [vmem:[%s260 + $0x18] sm:$0xff] %v522
        %s531 = sand.u32 %s118, 1
        %s532 = scalar_lea.sflag [#allocation4], %s531
        %s533 = sand.u32 %s118, 1
        %s534 = smul.addr %s533, 32
        %s535 = scalar_lea.vmem [#allocation8], %s534
        // Predicated region
        $region45: #{tpu_custom_call.1} parent=31 // pred_check
          %p536 = pneg %p128
        $region46: #{tpu_custom_call.1} parent=31 // pred_check_branch
          %538 = sbr.rel (%p536) target = $region48
        $region47: #{tpu_custom_call.1} parent=31 // pred_region
          %s539 = smul.u32 4, %s25
          %s541 = ssub.s32 512, 512
          %542 = vsyncadd %s532, %s541
          %s543 = smul.addr %s539, 2
          %s544 = smul.addr %s26, 16
          %s545 = sadd.s32 %s543, %s544
          %s546 = smul.addr %s545, 64
          %s547 = scalar_lea.hbm %s3, %s546
          %s548 = sshll.u32 %s535, 4
          %s549 = int_to_ptr.vmem [resolvable:$true] %s548
          %554 = dma.vmem_to_hbm [thread:$0]  %s549, 512, %s547, %s532, 128, 128, 8
        $region48: #{tpu_custom_call.1} parent=31 // pred_fallthru
          _
      $region32: #{tpu_custom_call.1} parent=5 // pred_fallthru
        _
      %p555 = scmp.le.s32.totalorder 2, %s16
      // Predicated region
      $region49: #{tpu_custom_call.1} parent=5 // pred_check
        %p556 = pneg %p555
      $region50: #{tpu_custom_call.1} parent=5 // pred_check_branch
        %558 = sbr.rel (%p556) target = $region52
      $region51: #{tpu_custom_call.1} parent=5 // pred_region
        %s559 = ssub.s32 %s16, 2
        // Predicated region
        $region53: #{tpu_custom_call.1} parent=51 // pred_check
          %p560 = pneg %p134
        $region54: #{tpu_custom_call.1} parent=51 // pred_check_branch
          %562 = sbr.rel (%p560) target = $region56
        $region55: #{tpu_custom_call.1} parent=51 // pred_region
          %s563 = sand.u32 %s119, 1
          %s564 = scalar_lea.sflag [#allocation4], %s563
          %s565 = sand.u32 %s119, 1
          %s566 = smul.addr %s565, 32
          %s567 = scalar_lea.vmem [#allocation8], %s566
          %568 = dma.done %s564, 512
        $region56: #{tpu_custom_call.1} parent=51 // pred_fallthru
          _
      $region52: #{tpu_custom_call.1} parent=5 // pred_fallthru
        _
    $region6: #{tpu_custom_call.1} parent=1 // loop_footer
      %s20 = sadd.s32 1, %s16
    $region7: #{tpu_custom_call.1} parent=1 // loop_footer_branch
      %15 = sbr.rel target = $region3
    $region8: #{tpu_custom_call.1} parent=1 // loop_exit
      _
    %569 = vsyncpa [#allocation3], 1
    %s570 = scalar_lea.sflag [#allocation3], 1
    %571 = vsyncpa %s570, 1
    %572 = vsyncpa [#allocation6], 1
    %573 = vsyncpa [#allocation4], 1
    %s574 = scalar_lea.sflag [#allocation4], 1
    %575 = vsyncpa %s574, 1

</llo_original>
